<compile_context>
chip_gen: v5e
topology: v5e:2x2
jax: 0.10.0
libtpu: 0.0.40
codegen_flags: <defaults>
</compile_context>

<pallas_src>
import math

import jax
import jax.numpy as jnp
from jax import lax
from jax.experimental import pallas as pl
from jax.experimental.pallas import tpu as pltpu


def make_fixed_embedding_table(c_in: int, d_model: int) -> jnp.ndarray:
    """Deterministic construction identical to the PyTorch __init__."""
    position = jnp.arange(c_in, dtype=jnp.float32)[:, None]                      # (c_in, 1)
    div_term = jnp.exp(
        jnp.arange(0, d_model, 2, dtype=jnp.float32) * (-math.log(10000.0) / d_model)
    )                                                                            # (d_model//2,)
    w = jnp.zeros((c_in, d_model), jnp.float32)
    w = w.at[:, 0::2].set(jnp.sin(position * div_term))
    w = w.at[:, 1::2].set(jnp.cos(position * div_term))
    return w


def _cdiv(a: int, b: int) -> int:
    return (a + b - 1) // b


def _round_up(x: int, m: int) -> int:
    return ((x + m - 1) // m) * m


def _pick_fold(d_model: int) -> int:
    # Pack as many tokens per output row as fills 256 lanes (v6e/v7x MXU width), falling
    # back to 128, else no folding (row stays the full d_model, still a legal full-dim block).
    for row_w in (256, 128):
        if d_model <= row_w and row_w % d_model == 0:
            return row_w // d_model
    return 1


def _embed_kernel(idx_ref, wblk_ref, o_ref):
    # idx_ref:  (TILE_R, FOLD)             int32   -- FOLD consecutive token indices per row
    # wblk_ref: (FOLD*c_in, FOLD*d_model)  float32 -- block-diagonal copy of the fixed table
    # o_ref:    (TILE_R, FOLD*d_model)     float32 -- lane-dense output rows
    tile_r, fold = idx_ref.shape
    kdim = wblk_ref.shape[0]
    c_in = kdim // fold

    idx = idx_ref[...]                                                   # (TILE_R, FOLD)
    k_iota = lax.broadcasted_iota(jnp.int32, (tile_r, kdim), 1)          # column index

    # Slot s of a row matches column s*c_in + idx[:, s]; slots are disjoint so OR is exact,
    # and a single final cast replaces fold separate f32 converts + adds.
    hit = k_iota == idx[:, 0:1]
    for s in range(1, fold):                                             # fold is static
        hit = jnp.logical_or(hit, k_iota == (idx[:, s:s + 1] + s * c_in))
    onehot = hit.astype(jnp.float32)

    # MXU gather: each output row is FOLD embeddings laid out back-to-back.
    # precision=HIGHEST forces the full multi-pass f32 path (no bf16 truncation of the table).
    o_ref[...] = jnp.dot(
        onehot,
        wblk_ref[...],
        preferred_element_type=jnp.float32,
        precision=lax.Precision.HIGHEST,
    )


def _fixed_embedding_lookup(x, wblk, *, d_model, fold, tile_rows):
    B, L = x.shape
    kdim, row_w = wblk.shape
    n = B * L
    n_rows = _cdiv(n, fold)                       # 128/256-lane output rows actually needed

    # ---- tile selection -------------------------------------------------------------
    if n_rows <= 8:
        tile_r = n_rows                           # single block == full array dims (legal)
    else:
        tile_r = _round_up(min(tile_rows, n_rows), 8)
        if _cdiv(n_rows, tile_r) < 2:
            # v7x megacore: keep >= 2 grid steps so both TensorCores get work
            # (harmless no-op on single-TC v5e/v6e).
            half = _round_up(_cdiv(n_rows, 2), 8)
            if half < n_rows:
                tile_r = half
    grid_steps = _cdiv(n_rows, tile_r)

    # Pad only the tiny int32 index stream to the grid extent; the output stays unpadded
    # (Pallas clips the ragged last output block), so no full-output slice copy is needed
    # when n % fold == 0.
    n_rows_in = grid_steps * tile_r
    idx_flat = x.reshape(-1).astype(jnp.int32)
    if n_rows_in * fold != n:
        idx_flat = jnp.pad(idx_flat, (0, n_rows_in * fold - n))   # index 0 is always valid
    idx_folded = idx_flat.reshape(n_rows_in, fold)

    out_folded = pl.pallas_call(
        _embed_kernel,
        out_shape=jax.ShapeDtypeStruct((n_rows, row_w), jnp.float32),
        grid=(grid_steps,),
        in_specs=[
            pl.BlockSpec((tile_r, fold), lambda i: (i, 0)),       # indices, tiled over rows
            pl.BlockSpec((kdim, row_w), lambda i: (0, 0)),        # constant table: DMAed once
        ],
        out_specs=pl.BlockSpec((tile_r, row_w), lambda i: (i, 0)),
        compiler_params=pltpu.CompilerParams(
            dimension_semantics=("parallel",),    # independent tiles -> megacore split on v7x
            vmem_limit_bytes=32 * 1024 * 1024,
        ),
    )(idx_folded, wblk)

    # (n_rows, fold*d_model) and (n_rows*fold, d_model) share the same row-major layout,
    # so this un-fold is a metadata reshape.  The [:n] slice only triggers on ragged folds.
    out = out_folded.reshape(n_rows * fold, d_model)
    if n_rows * fold != n:
        out = out[:n]
    return out.reshape(B, L, d_model)


def make_fixed_embedding(c_in: int, d_model: int, *, tile_rows: int = 2048):
    """Build the frozen table + block-diagonal MXU table once; return (forward, weight)."""
    w = make_fixed_embedding_table(c_in, d_model)
    fold = _pick_fold(d_model)
    # Block (s, s) == w, so onehot @ wblk fills slot s of each packed output row.
    wblk = jnp.kron(jnp.eye(fold, dtype=jnp.float32), w)          # (fold*c_in, fold*d_model)

    def forward(x, *, tile_rows: int | None = None):
        tr = tile_rows if tile_rows is not None else make_fixed_embedding._default_tile_rows
        return _fixed_embedding_lookup(x, wblk, d_model=d_model, fold=fold, tile_rows=tr)

    make_fixed_embedding._default_tile_rows = tile_rows
    return forward, w


if __name__ == "__main__":
    # Shapes consistent with FixedEmbedding's use for temporal features: small vocab, hidden=32.
    c_in, d_model = 13, 32
    B, L = 2, 8

    key = jax.random.PRNGKey(0)
    k1, k2 = jax.random.split(key)

    forward, w = make_fixed_embedding(c_in, d_model)

    x = jax.random.randint(k1, (B, L), minval=0, maxval=c_in, dtype=jnp.int32)
    out = jax.block_until_ready(forward(x))

    # Reference: plain gather (== nn.Embedding lookup with the frozen weight).
    ref = jnp.take(w, x, axis=0)
    assert out.shape == (B, L, d_model), out.shape
    assert out.dtype == jnp.float32
    assert jnp.allclose(out, ref, atol=1e-6, rtol=1e-6), "mismatch vs reference gather"

    # Exercise the multi-tile grid + ragged last output block + ragged-fold slice path.
    B2, L2 = 3, 37
    x2 = jax.random.randint(k2, (B2, L2), minval=0, maxval=c_in, dtype=jnp.int32)
    out2 = jax.block_until_ready(forward(x2, tile_rows=8))
    ref2 = jnp.take(w, x2, axis=0)
    assert out2.shape == (B2, L2, d_model)
    assert jnp.allclose(out2, ref2, atol=1e-6, rtol=1e-6), "mismatch on tiled/ragged path"

    print("KERNEL_OK")
</pallas_src>

<mosaic_0001>
module attributes {stable_mosaic.version = 11 : i64} {
  func.func @_embed_kernel(%arg0: i32, %arg1: memref<2x8xi32, #tpu.memory_space<vmem>>, %arg2: memref<104x256xf32, #tpu.memory_space<vmem>>, %arg3: memref<2x256xf32, #tpu.memory_space<vmem>>) attributes {dimension_semantics = [#tpu.dimension_semantics<parallel>], iteration_bounds = array<i64: 1>, scalar_prefetch = 0 : i64, scratch_operands = 0 : i64, tpu.core_type = #tpu.core_type<tc>, window_params = [{transform_indices = @transform_0, window_bounds = array<i64: 2, 8>}, {pipeline_mode = #tpu.pipeline_mode<synchronous>, transform_indices = @transform_1, window_bounds = array<i64: 104, 256>}, {transform_indices = @transform_2, window_bounds = array<i64: 2, 256>}]} {
    %c0 = arith.constant 0 : index
    %c0_0 = arith.constant 0 : index
    %0 = vector.load %arg1[%c0, %c0_0] : memref<2x8xi32, #tpu.memory_space<vmem>>, vector<2x8xi32>
    %1 = tpu.iota {dimensions = array<i32: 1>} : vector<2x104xi32>
    %2 = vector.extract_strided_slice %0 {offsets = [0, 0], sizes = [2, 1], strides = [1, 1]} : vector<2x8xi32> to vector<2x1xi32>
    %3 = vector.broadcast %2 : vector<2x1xi32> to vector<2x104xi32>
    %4 = arith.cmpi eq, %1, %3 : vector<2x104xi32>
    %5 = vector.extract_strided_slice %0 {offsets = [0, 1], sizes = [2, 1], strides = [1, 1]} : vector<2x8xi32> to vector<2x1xi32>
    %c13_i32 = arith.constant 13 : i32
    %6 = vector.broadcast %c13_i32 : i32 to vector<2x1xi32>
    %7 = arith.addi %5, %6 : vector<2x1xi32>
    %8 = vector.broadcast %7 : vector<2x1xi32> to vector<2x104xi32>
    %9 = arith.cmpi eq, %1, %8 : vector<2x104xi32>
    %10 = arith.ori %4, %9 : vector<2x104xi1>
    %11 = vector.extract_strided_slice %0 {offsets = [0, 2], sizes = [2, 1], strides = [1, 1]} : vector<2x8xi32> to vector<2x1xi32>
    %c26_i32 = arith.constant 26 : i32
    %12 = vector.broadcast %c26_i32 : i32 to vector<2x1xi32>
    %13 = arith.addi %11, %12 : vector<2x1xi32>
    %14 = vector.broadcast %13 : vector<2x1xi32> to vector<2x104xi32>
    %15 = arith.cmpi eq, %1, %14 : vector<2x104xi32>
    %16 = arith.ori %10, %15 : vector<2x104xi1>
    %17 = vector.extract_strided_slice %0 {offsets = [0, 3], sizes = [2, 1], strides = [1, 1]} : vector<2x8xi32> to vector<2x1xi32>
    %c39_i32 = arith.constant 39 : i32
    %18 = vector.broadcast %c39_i32 : i32 to vector<2x1xi32>
    %19 = arith.addi %17, %18 : vector<2x1xi32>
    %20 = vector.broadcast %19 : vector<2x1xi32> to vector<2x104xi32>
    %21 = arith.cmpi eq, %1, %20 : vector<2x104xi32>
    %22 = arith.ori %16, %21 : vector<2x104xi1>
    %23 = vector.extract_strided_slice %0 {offsets = [0, 4], sizes = [2, 1], strides = [1, 1]} : vector<2x8xi32> to vector<2x1xi32>
    %c52_i32 = arith.constant 52 : i32
    %24 = vector.broadcast %c52_i32 : i32 to vector<2x1xi32>
    %25 = arith.addi %23, %24 : vector<2x1xi32>
    %26 = vector.broadcast %25 : vector<2x1xi32> to vector<2x104xi32>
    %27 = arith.cmpi eq, %1, %26 : vector<2x104xi32>
    %28 = arith.ori %22, %27 : vector<2x104xi1>
    %29 = vector.extract_strided_slice %0 {offsets = [0, 5], sizes = [2, 1], strides = [1, 1]} : vector<2x8xi32> to vector<2x1xi32>
    %c65_i32 = arith.constant 65 : i32
    %30 = vector.broadcast %c65_i32 : i32 to vector<2x1xi32>
    %31 = arith.addi %29, %30 : vector<2x1xi32>
    %32 = vector.broadcast %31 : vector<2x1xi32> to vector<2x104xi32>
    %33 = arith.cmpi eq, %1, %32 : vector<2x104xi32>
    %34 = arith.ori %28, %33 : vector<2x104xi1>
    %35 = vector.extract_strided_slice %0 {offsets = [0, 6], sizes = [2, 1], strides = [1, 1]} : vector<2x8xi32> to vector<2x1xi32>
    %c78_i32 = arith.constant 78 : i32
    %36 = vector.broadcast %c78_i32 : i32 to vector<2x1xi32>
    %37 = arith.addi %35, %36 : vector<2x1xi32>
    %38 = vector.broadcast %37 : vector<2x1xi32> to vector<2x104xi32>
    %39 = arith.cmpi eq, %1, %38 : vector<2x104xi32>
    %40 = arith.ori %34, %39 : vector<2x104xi1>
    %41 = vector.extract_strided_slice %0 {offsets = [0, 7], sizes = [2, 1], strides = [1, 1]} : vector<2x8xi32> to vector<2x1xi32>
    %c91_i32 = arith.constant 91 : i32
    %42 = vector.broadcast %c91_i32 : i32 to vector<2x1xi32>
    %43 = arith.addi %41, %42 : vector<2x1xi32>
    %44 = vector.broadcast %43 : vector<2x1xi32> to vector<2x104xi32>
    %45 = arith.cmpi eq, %1, %44 : vector<2x104xi32>
    %46 = arith.ori %40, %45 : vector<2x104xi1>
    %47 = arith.extui %46 : vector<2x104xi1> to vector<2x104xi32>
    %48 = arith.sitofp %47 : vector<2x104xi32> to vector<2x104xf32>
    %c0_1 = arith.constant 0 : index
    %c0_2 = arith.constant 0 : index
    %49 = vector.load %arg2[%c0_1, %c0_2] : memref<104x256xf32, #tpu.memory_space<vmem>>, vector<104x256xf32>
    %cst = arith.constant dense<0.000000e+00> : vector<2x256xf32>
    %50 = tpu.matmul %48, %49, %cst {dimension_numbers = #tpu.dot_dimension_numbers<[1], [0], [0], [1], [0, 0, 1, 1], [], []>, precision = #tpu.contract_precision<fp32>} : vector<2x104xf32>, vector<104x256xf32>, vector<2x256xf32> -> vector<2x256xf32>
    %c0_3 = arith.constant 0 : index
    %c0_4 = arith.constant 0 : index
    %51 = vector.load %arg3[%c0_3, %c0_4] : memref<2x256xf32, #tpu.memory_space<vmem>>, vector<2x256xf32>
    tpu.vector_store %arg3[%c0_3, %c0_4], %50 {strides = array<i32>} : memref<2x256xf32, #tpu.memory_space<vmem>>, vector<2x256xf32>,
    return
  }
  func.func @transform_0(%arg0: i32) -> (i32, i32) {
    %c0_i32 = arith.constant 0 : i32
    %c0_i32_0 = arith.constant 0 : i32
    return %arg0, %c0_i32 : i32, i32
  }
  func.func @transform_1(%arg0: i32) -> (i32, i32) {
    %c0_i32 = arith.constant 0 : i32
    %c0_i32_0 = arith.constant 0 : i32
    %c0_i32_1 = arith.constant 0 : i32
    return %c0_i32, %c0_i32_0 : i32, i32
  }
  func.func @transform_2(%arg0: i32) -> (i32, i32) {
    %c0_i32 = arith.constant 0 : i32
    %c0_i32_0 = arith.constant 0 : i32
    return %arg0, %c0_i32 : i32, i32
  }
}

</mosaic_0001>

<llo_original>
// kernel: tpu_custom_call.1
$region0: #{tpu_custom_call.1}
  #allocation0 [shape = 'u32[]', space=smem, size = 0x4, offset = 0x4, fixed_abs, tag = 'smem constant byte address 0x4 - core index']
  #allocation1 [shape = 'u32[72,128]{1,0:T(1,128)}', space=vmem, size = 0x9000, scoped, tag = 'internal scratch']
  %s0 = inlined_call_operand.hbm [shape: s32[2,8], index: 0, kind: input, shape index: {}]
  %s1 = inlined_call_operand.hbm [shape: f32[104,256], index: 1, kind: input, shape index: {}]
  %s2 = inlined_call_operand.hbm [shape: f32[2,256], index: 2, kind: output, shape index: {}]
  %s3 = sld [smem:[#allocation0]]
  $region26: #{tpu_custom_call.1} parent=0
    _
  %s5 = ssub.s32 1, %s3
  %s6 = scalar_select 0, %s5, %s3
  $region1: #{tpu_custom_call.1} parent=0
    #allocation2 [shape = 'u8[1024]{0}', space=vmem, size = 0x400, scoped, tag = 'input window, operand 0, single buffered']
    #allocation3 [shape = 's32[1]{0}', space=sflag, size = 0x4, scoped, tag = 'scoped memory for tpu_custom_call.1']
    #allocation4 [shape = 's32[1]{0}', space=sflag, size = 0x4, scoped, tag = 'scoped memory for tpu_custom_call.1']
    #allocation5 [shape = 'u8[106496]{0}', space=vmem, size = 0x1a000, scoped, tag = 'input window, operand 1, single buffered']
    #allocation6 [shape = 's32[1]{0}', space=sflag, size = 0x4, scoped, tag = 'scoped memory for tpu_custom_call.1']
    #allocation7 [shape = 'u8[2048]{0}', space=vmem, size = 0x800, scoped, tag = 'output window, operand 0, single buffered']
    %7 = vsyncpa [#allocation3], 0
    %8 = vsyncpa [#allocation6], 0
    %9 = vsyncpa [#allocation4], 0
    // Predicated region
    $region2: #{tpu_custom_call.1} parent=1 // pred_check
      _
    $region3: #{tpu_custom_call.1} parent=1 // pred_check_branch
      %11 = sbr.rel (0) target = $region5
    $region4: #{tpu_custom_call.1} parent=1 // pred_region
      %13 = vsyncadd [#allocation3], 0
      %s15 = sshll.u32 %s0, 4
      %s16 = int_to_ptr.hbm [resolvable:$true] %s15
      %s17 = sshll.u32 [#allocation2], 4
      %s18 = int_to_ptr.vmem [resolvable:$true] %s17
      %20 = dma.hbm_to_vmem [thread:$0]  %s16, 32, %s18, [#allocation3]
    $region5: #{tpu_custom_call.1} parent=1 // pred_fallthru
      _
    // Predicated region
    $region6: #{tpu_custom_call.1} parent=1 // pred_check
      _
    $region7: #{tpu_custom_call.1} parent=1 // pred_check_branch
      %22 = sbr.rel (0) target = $region9
    $region8: #{tpu_custom_call.1} parent=1 // pred_region
      %24 = vsyncadd [#allocation6], 0
      %s25 = sshll.u32 %s1, 4
      %s26 = int_to_ptr.hbm [resolvable:$true] %s25
      %s27 = sshll.u32 [#allocation5], 4
      %s28 = int_to_ptr.vmem [resolvable:$true] %s27
      %33 = dma.hbm_to_vmem [thread:$0]  %s26, 3328, %s28, [#allocation6], 256, 256, 16
    $region9: #{tpu_custom_call.1} parent=1 // pred_fallthru
      _
    // Predicated region
    $region10: #{tpu_custom_call.1} parent=1 // pred_check
      _
    $region11: #{tpu_custom_call.1} parent=1 // pred_check_branch
      %35 = sbr.rel (0) target = $region13
    $region12: #{tpu_custom_call.1} parent=1 // pred_region
      %37 = dma.done [#allocation3], 32
    $region13: #{tpu_custom_call.1} parent=1 // pred_fallthru
      _
    // Predicated region
    $region14: #{tpu_custom_call.1} parent=1 // pred_check
      _
    $region15: #{tpu_custom_call.1} parent=1 // pred_check_branch
      %39 = sbr.rel (0) target = $region17
    $region16: #{tpu_custom_call.1} parent=1 // pred_region
      %41 = dma.done [#allocation6], 3328
    $region17: #{tpu_custom_call.1} parent=1 // pred_fallthru
      _
    %v42 = vld [vmem:[#allocation2] sm:$0x3]
    %v43 = vlaneseq
    %v44 = vand.u32 %v43, 127
    %45 = vset.pattern.permute.xlu0 0
    %46 = vperm.xlu0 %45, %v42
    %v47 = vpop.permute.xlu0 %46
    %vm48 = vcmp.eq.s32.totalorder %v44, %v47
    %v49 = vadd.s32 %v42, 13
    %50 = vset.pattern.permute.xlu0 1
    %51 = vperm.xlu0 %50, %v49
    %v52 = vpop.permute.xlu0 %51
    %vm53 = vcmp.eq.s32.totalorder %v44, %v52
    %vm54 = vmor %vm48, %vm53
    %v55 = vadd.s32 %v42, 26
    %56 = vset.pattern.permute.xlu0 2
    %57 = vperm.xlu0 %56, %v55
    %v58 = vpop.permute.xlu0 %57
    %vm59 = vcmp.eq.s32.totalorder %v44, %v58
    %vm60 = vmor %vm54, %vm59
    %v61 = vadd.s32 %v42, 39
    %62 = vset.pattern.permute.xlu0 3
    %63 = vperm.xlu0 %62, %v61
    %v64 = vpop.permute.xlu0 %63
    %vm65 = vcmp.eq.s32.totalorder %v44, %v64
    %vm66 = vmor %vm60, %vm65
    %v67 = vadd.s32 %v42, 52
    %68 = vset.pattern.permute.xlu0 4
    %69 = vperm.xlu0 %68, %v67
    %v70 = vpop.permute.xlu0 %69
    %vm71 = vcmp.eq.s32.totalorder %v44, %v70
    %vm72 = vmor %vm66, %vm71
    %v73 = vadd.s32 %v42, 65
    %74 = vset.pattern.permute.xlu0 5
    %75 = vperm.xlu0 %74, %v73
    %v76 = vpop.permute.xlu0 %75
    %vm77 = vcmp.eq.s32.totalorder %v44, %v76
    %vm78 = vmor %vm72, %vm77
    %v79 = vadd.s32 %v42, 78
    %80 = vset.pattern.permute.xlu0 6
    %81 = vperm.xlu0 %80, %v79
    %v82 = vpop.permute.xlu0 %81
    %vm83 = vcmp.eq.s32.totalorder %v44, %v82
    %vm84 = vmor %vm78, %vm83
    %v85 = vadd.s32 %v42, 91
    %86 = vset.pattern.permute.xlu0 7
    %87 = vperm.xlu0 %86, %v85
    %v88 = vpop.permute.xlu0 %87
    %vm89 = vcmp.eq.s32.totalorder %v44, %v88
    %vm90 = vmor %vm84, %vm89
    %v91 = vsel %vm90, 1, 0
    %v92 = vcvt.s32.f32 %v91
    %v93 = vld [vmem:[#allocation5] sm:$0xff]
    %v94 = vld [vmem:[#allocation5 + $0x8] sm:$0xff]
    %v95 = vld [vmem:[#allocation5 + $0x10] sm:$0xff]
    %v96 = vld [vmem:[#allocation5 + $0x18] sm:$0xff]
    %v97 = vld [vmem:[#allocation5 + $0x20] sm:$0xff]
    %v98 = vld [vmem:[#allocation5 + $0x28] sm:$0xff]
    %v99 = vld [vmem:[#allocation5 + $0x30] sm:$0xff]
    %v100 = vld [vmem:[#allocation5 + $0x38] sm:$0xff]
    %v101 = vld [vmem:[#allocation5 + $0x40] sm:$0xff]
    %v102 = vld [vmem:[#allocation5 + $0x48] sm:$0xff]
    %v103 = vld [vmem:[#allocation5 + $0x50] sm:$0xff]
    %v104 = vld [vmem:[#allocation5 + $0x58] sm:$0xff]
    %v105 = vld [vmem:[#allocation5 + $0x60] sm:$0xff]
    %v106 = vld [vmem:[#allocation5 + $0x68] sm:$0xff]
    %v107 = vld [vmem:[#allocation5 + $0x70] sm:$0xff]
    %v108 = vld [vmem:[#allocation5 + $0x78] sm:$0xff]
    %v109 = vld [vmem:[#allocation5 + $0x80] sm:$0xff]
    %v110 = vld [vmem:[#allocation5 + $0x88] sm:$0xff]
    %v111 = vld [vmem:[#allocation5 + $0x90] sm:$0xff]
    %v112 = vld [vmem:[#allocation5 + $0x98] sm:$0xff]
    %v113 = vld [vmem:[#allocation5 + $0xa0] sm:$0xff]
    %v114 = vld [vmem:[#allocation5 + $0xa8] sm:$0xff]
    %v115 = vld [vmem:[#allocation5 + $0xb0] sm:$0xff]
    %v116 = vld [vmem:[#allocation5 + $0xb8] sm:$0xff]
    %v117 = vld [vmem:[#allocation5 + $0xc0] sm:$0xff]
    %v118 = vld [vmem:[#allocation5 + $0xc8] sm:$0xff]
    %vm119 = vcmask 850944
    %v121 = vsel %vm119, %v92, 0
    %123 = vmatpush.msra.mxu0 0.0
    %124 = vmatpush.msra.mxu0 0.0
    %125 = vmatpush.msra.mxu0 0.0
    %v126 = vand.u32 %v117, 4294901760
    %127 = vmatpush.msra.mxu0 %v126
    %v128 = vand.u32 %v115, 4294901760
    %129 = vmatpush.msra.mxu0 %v128
    %v130 = vand.u32 %v113, 4294901760
    %131 = vmatpush.msra.mxu0 %v130
    %v132 = vand.u32 %v111, 4294901760
    %133 = vmatpush.msra.mxu0 %v132
    %v134 = vand.u32 %v109, 4294901760
    %135 = vmatpush.msra.mxu0 %v134
    %v136 = vand.u32 %v107, 4294901760
    %137 = vmatpush.msra.mxu0 %v136
    %v138 = vand.u32 %v105, 4294901760
    %139 = vmatpush.msra.mxu0 %v138
    %v140 = vand.u32 %v103, 4294901760
    %141 = vmatpush.msra.mxu0 %v140
    %v142 = vand.u32 %v101, 4294901760
    %143 = vmatpush.msra.mxu0 %v142
    %v144 = vand.u32 %v99, 4294901760
    %145 = vmatpush.msra.mxu0 %v144
    %v146 = vand.u32 %v97, 4294901760
    %147 = vmatpush.msra.mxu0 %v146
    %v148 = vand.u32 %v95, 4294901760
    %149 = vmatpush.msra.mxu0 %v148
    %v150 = vand.u32 %v93, 4294901760
    %151 = vmatpush.msra.mxu0 %v150
    %v152 = vand.u32 %v121, 4294901760
    %v153 = vsub.f32 %v121, %v152
    %v154 = vand.u32 %v153, 4294901760
    %v155 = vsub.f32 %v153, %v154
    %v156 = vand.u32 %v155, 4294901760
    %157 = vmatmul.f32.gmra.mxu0 %v156
    %v158 = vpop.f32.mrf.mxu0
    %v159 = vadd.f32 0.0, %v158
    %160 = vdwg.mxu0
    %161 = vmatpush.msra.mxu0 0.0
    %162 = vmatpush.msra.mxu0 0.0
    %163 = vmatpush.msra.mxu0 0.0
    %v164 = vand.u32 %v117, 4294901760
    %v165 = vsub.f32 %v117, %v164
    %v166 = vand.u32 %v165, 4294901760
    %v167 = vsub.f32 %v165, %v166
    %v168 = vand.u32 %v167, 4294901760
    %169 = vmatpush.msra.mxu0 %v168
    %v170 = vand.u32 %v115, 4294901760
    %v171 = vsub.f32 %v115, %v170
    %v172 = vand.u32 %v171, 4294901760
    %v173 = vsub.f32 %v171, %v172
    %v174 = vand.u32 %v173, 4294901760
    %175 = vmatpush.msra.mxu0 %v174
    %v176 = vand.u32 %v113, 4294901760
    %v177 = vsub.f32 %v113, %v176
    %v178 = vand.u32 %v177, 4294901760
    %v179 = vsub.f32 %v177, %v178
    %v180 = vand.u32 %v179, 4294901760
    %181 = vmatpush.msra.mxu0 %v180
    %v182 = vand.u32 %v111, 4294901760
    %v183 = vsub.f32 %v111, %v182
    %v184 = vand.u32 %v183, 4294901760
    %v185 = vsub.f32 %v183, %v184
    %v186 = vand.u32 %v185, 4294901760
    %187 = vmatpush.msra.mxu0 %v186
    %v188 = vand.u32 %v109, 4294901760
    %v189 = vsub.f32 %v109, %v188
    %v190 = vand.u32 %v189, 4294901760
    %v191 = vsub.f32 %v189, %v190
    %v192 = vand.u32 %v191, 4294901760
    %193 = vmatpush.msra.mxu0 %v192
    %v194 = vand.u32 %v107, 4294901760
    %v195 = vsub.f32 %v107, %v194
    %v196 = vand.u32 %v195, 4294901760
    %v197 = vsub.f32 %v195, %v196
    %v198 = vand.u32 %v197, 4294901760
    %199 = vmatpush.msra.mxu0 %v198
    %v200 = vand.u32 %v105, 4294901760
    %v201 = vsub.f32 %v105, %v200
    %v202 = vand.u32 %v201, 4294901760
    %v203 = vsub.f32 %v201, %v202
    %v204 = vand.u32 %v203, 4294901760
    %205 = vmatpush.msra.mxu0 %v204
    %v206 = vand.u32 %v103, 4294901760
    %v207 = vsub.f32 %v103, %v206
    %v208 = vand.u32 %v207, 4294901760
    %v209 = vsub.f32 %v207, %v208
    %v210 = vand.u32 %v209, 4294901760
    %211 = vmatpush.msra.mxu0 %v210
    %v212 = vand.u32 %v101, 4294901760
    %v213 = vsub.f32 %v101, %v212
    %v214 = vand.u32 %v213, 4294901760
    %v215 = vsub.f32 %v213, %v214
    %v216 = vand.u32 %v215, 4294901760
    %217 = vmatpush.msra.mxu0 %v216
    %v218 = vand.u32 %v99, 4294901760
    %v219 = vsub.f32 %v99, %v218
    %v220 = vand.u32 %v219, 4294901760
    %v221 = vsub.f32 %v219, %v220
    %v222 = vand.u32 %v221, 4294901760
    %223 = vmatpush.msra.mxu0 %v222
    %v224 = vand.u32 %v97, 4294901760
    %v225 = vsub.f32 %v97, %v224
    %v226 = vand.u32 %v225, 4294901760
    %v227 = vsub.f32 %v225, %v226
    %v228 = vand.u32 %v227, 4294901760
    %229 = vmatpush.msra.mxu0 %v228
    %v230 = vand.u32 %v95, 4294901760
    %v231 = vsub.f32 %v95, %v230
    %v232 = vand.u32 %v231, 4294901760
    %v233 = vsub.f32 %v231, %v232
    %v234 = vand.u32 %v233, 4294901760
    %235 = vmatpush.msra.mxu0 %v234
    %v236 = vand.u32 %v93, 4294901760
    %v237 = vsub.f32 %v93, %v236
    %v238 = vand.u32 %v237, 4294901760
    %v239 = vsub.f32 %v237, %v238
    %v240 = vand.u32 %v239, 4294901760
    %241 = vmatpush.msra.mxu0 %v240
    %v242 = vand.u32 %v121, 4294901760
    %243 = vmatmul.f32.gmra.mxu0 %v242
    %v244 = vpop.f32.mrf.mxu0
    %v245 = vadd.f32 %v159, %v244
    %246 = vdwg.mxu0
    %247 = vmatpush.msra.mxu0 0.0
    %248 = vmatpush.msra.mxu0 0.0
    %249 = vmatpush.msra.mxu0 0.0
    %v250 = vand.u32 %v117, 4294901760
    %v251 = vsub.f32 %v117, %v250
    %252 = vmatpush.msra.mxu0 %v251
    %v253 = vand.u32 %v115, 4294901760
    %v254 = vsub.f32 %v115, %v253
    %255 = vmatpush.msra.mxu0 %v254
    %v256 = vand.u32 %v113, 4294901760
    %v257 = vsub.f32 %v113, %v256
    %258 = vmatpush.msra.mxu0 %v257
    %v259 = vand.u32 %v111, 4294901760
    %v260 = vsub.f32 %v111, %v259
    %261 = vmatpush.msra.mxu0 %v260
    %v262 = vand.u32 %v109, 4294901760
    %v263 = vsub.f32 %v109, %v262
    %264 = vmatpush.msra.mxu0 %v263
    %v265 = vand.u32 %v107, 4294901760
    %v266 = vsub.f32 %v107, %v265
    %267 = vmatpush.msra.mxu0 %v266
    %v268 = vand.u32 %v105, 4294901760
    %v269 = vsub.f32 %v105, %v268
    %270 = vmatpush.msra.mxu0 %v269
    %v271 = vand.u32 %v103, 4294901760
    %v272 = vsub.f32 %v103, %v271
    %273 = vmatpush.msra.mxu0 %v272
    %v274 = vand.u32 %v101, 4294901760
    %v275 = vsub.f32 %v101, %v274
    %276 = vmatpush.msra.mxu0 %v275
    %v277 = vand.u32 %v99, 4294901760
    %v278 = vsub.f32 %v99, %v277
    %279 = vmatpush.msra.mxu0 %v278
    %v280 = vand.u32 %v97, 4294901760
    %v281 = vsub.f32 %v97, %v280
    %282 = vmatpush.msra.mxu0 %v281
    %v283 = vand.u32 %v95, 4294901760
    %v284 = vsub.f32 %v95, %v283
    %285 = vmatpush.msra.mxu0 %v284
    %v286 = vand.u32 %v93, 4294901760
    %v287 = vsub.f32 %v93, %v286
    %288 = vmatpush.msra.mxu0 %v287
    %v289 = vand.u32 %v121, 4294901760
    %v290 = vsub.f32 %v121, %v289
    %291 = vmatmul.f32.gmra.mxu0 %v290
    %v292 = vpop.f32.mrf.mxu0
    %v293 = vadd.f32 %v245, %v292
    %294 = vdwg.mxu0
    %295 = vmatpush.msra.mxu0 0.0
    %296 = vmatpush.msra.mxu0 0.0
    %297 = vmatpush.msra.mxu0 0.0
    %v298 = vand.u32 %v117, 4294901760
    %299 = vmatpush.msra.mxu0 %v298
    %v300 = vand.u32 %v115, 4294901760
    %301 = vmatpush.msra.mxu0 %v300
    %v302 = vand.u32 %v113, 4294901760
    %303 = vmatpush.msra.mxu0 %v302
    %v304 = vand.u32 %v111, 4294901760
    %305 = vmatpush.msra.mxu0 %v304
    %v306 = vand.u32 %v109, 4294901760
    %307 = vmatpush.msra.mxu0 %v306
    %v308 = vand.u32 %v107, 4294901760
    %309 = vmatpush.msra.mxu0 %v308
    %v310 = vand.u32 %v105, 4294901760
    %311 = vmatpush.msra.mxu0 %v310
    %v312 = vand.u32 %v103, 4294901760
    %313 = vmatpush.msra.mxu0 %v312
    %v314 = vand.u32 %v101, 4294901760
    %315 = vmatpush.msra.mxu0 %v314
    %v316 = vand.u32 %v99, 4294901760
    %317 = vmatpush.msra.mxu0 %v316
    %v318 = vand.u32 %v97, 4294901760
    %319 = vmatpush.msra.mxu0 %v318
    %v320 = vand.u32 %v95, 4294901760
    %321 = vmatpush.msra.mxu0 %v320
    %v322 = vand.u32 %v93, 4294901760
    %323 = vmatpush.msra.mxu0 %v322
    %v324 = vand.u32 %v121, 4294901760
    %v325 = vsub.f32 %v121, %v324
    %v326 = vand.u32 %v325, 4294901760
    %327 = vmatmul.f32.gmra.mxu0 %v326
    %v328 = vpop.f32.mrf.mxu0
    %v329 = vadd.f32 %v293, %v328
    %330 = vdwg.mxu0
    %331 = vmatpush.msra.mxu0 0.0
    %332 = vmatpush.msra.mxu0 0.0
    %333 = vmatpush.msra.mxu0 0.0
    %v334 = vand.u32 %v117, 4294901760
    %v335 = vsub.f32 %v117, %v334
    %v336 = vand.u32 %v335, 4294901760
    %337 = vmatpush.msra.mxu0 %v336
    %v338 = vand.u32 %v115, 4294901760
    %v339 = vsub.f32 %v115, %v338
    %v340 = vand.u32 %v339, 4294901760
    %341 = vmatpush.msra.mxu0 %v340
    %v342 = vand.u32 %v113, 4294901760
    %v343 = vsub.f32 %v113, %v342
    %v344 = vand.u32 %v343, 4294901760
    %345 = vmatpush.msra.mxu0 %v344
    %v346 = vand.u32 %v111, 4294901760
    %v347 = vsub.f32 %v111, %v346
    %v348 = vand.u32 %v347, 4294901760
    %349 = vmatpush.msra.mxu0 %v348
    %v350 = vand.u32 %v109, 4294901760
    %v351 = vsub.f32 %v109, %v350
    %v352 = vand.u32 %v351, 4294901760
    %353 = vmatpush.msra.mxu0 %v352
    %v354 = vand.u32 %v107, 4294901760
    %v355 = vsub.f32 %v107, %v354
    %v356 = vand.u32 %v355, 4294901760
    %357 = vmatpush.msra.mxu0 %v356
    %v358 = vand.u32 %v105, 4294901760
    %v359 = vsub.f32 %v105, %v358
    %v360 = vand.u32 %v359, 4294901760
    %361 = vmatpush.msra.mxu0 %v360
    %v362 = vand.u32 %v103, 4294901760
    %v363 = vsub.f32 %v103, %v362
    %v364 = vand.u32 %v363, 4294901760
    %365 = vmatpush.msra.mxu0 %v364
    %v366 = vand.u32 %v101, 4294901760
    %v367 = vsub.f32 %v101, %v366
    %v368 = vand.u32 %v367, 4294901760
    %369 = vmatpush.msra.mxu0 %v368
    %v370 = vand.u32 %v99, 4294901760
    %v371 = vsub.f32 %v99, %v370
    %v372 = vand.u32 %v371, 4294901760
    %373 = vmatpush.msra.mxu0 %v372
    %v374 = vand.u32 %v97, 4294901760
    %v375 = vsub.f32 %v97, %v374
    %v376 = vand.u32 %v375, 4294901760
    %377 = vmatpush.msra.mxu0 %v376
    %v378 = vand.u32 %v95, 4294901760
    %v379 = vsub.f32 %v95, %v378
    %v380 = vand.u32 %v379, 4294901760
    %381 = vmatpush.msra.mxu0 %v380
    %v382 = vand.u32 %v93, 4294901760
    %v383 = vsub.f32 %v93, %v382
    %v384 = vand.u32 %v383, 4294901760
    %385 = vmatpush.msra.mxu0 %v384
    %v386 = vand.u32 %v121, 4294901760
    %387 = vmatmul.f32.gmra.mxu0 %v386
    %v388 = vpop.f32.mrf.mxu0
    %v389 = vadd.f32 %v329, %v388
    %390 = vdwg.mxu0
    %391 = vmatpush.msra.mxu0 0.0
    %392 = vmatpush.msra.mxu0 0.0
    %393 = vmatpush.msra.mxu0 0.0
    %v394 = vand.u32 %v117, 4294901760
    %395 = vmatpush.msra.mxu0 %v394
    %v396 = vand.u32 %v115, 4294901760
    %397 = vmatpush.msra.mxu0 %v396
    %v398 = vand.u32 %v113, 4294901760
    %399 = vmatpush.msra.mxu0 %v398
    %v400 = vand.u32 %v111, 4294901760
    %401 = vmatpush.msra.mxu0 %v400
    %v402 = vand.u32 %v109, 4294901760
    %403 = vmatpush.msra.mxu0 %v402
    %v404 = vand.u32 %v107, 4294901760
    %405 = vmatpush.msra.mxu0 %v404
    %v406 = vand.u32 %v105, 4294901760
    %407 = vmatpush.msra.mxu0 %v406
    %v408 = vand.u32 %v103, 4294901760
    %409 = vmatpush.msra.mxu0 %v408
    %v410 = vand.u32 %v101, 4294901760
    %411 = vmatpush.msra.mxu0 %v410
    %v412 = vand.u32 %v99, 4294901760
    %413 = vmatpush.msra.mxu0 %v412
    %v414 = vand.u32 %v97, 4294901760
    %415 = vmatpush.msra.mxu0 %v414
    %v416 = vand.u32 %v95, 4294901760
    %417 = vmatpush.msra.mxu0 %v416
    %v418 = vand.u32 %v93, 4294901760
    %419 = vmatpush.msra.mxu0 %v418
    %v420 = vand.u32 %v121, 4294901760
    %421 = vmatmul.f32.gmra.mxu0 %v420
    %v422 = vpop.f32.mrf.mxu0
    %v423 = vadd.f32 %v389, %v422
    %424 = vdwg.mxu0
    %425 = vmatpush.msra.mxu0 0.0
    %426 = vmatpush.msra.mxu0 0.0
    %427 = vmatpush.msra.mxu0 0.0
    %v428 = vand.u32 %v118, 4294901760
    %429 = vmatpush.msra.mxu0 %v428
    %v430 = vand.u32 %v116, 4294901760
    %431 = vmatpush.msra.mxu0 %v430
    %v432 = vand.u32 %v114, 4294901760
    %433 = vmatpush.msra.mxu0 %v432
    %v434 = vand.u32 %v112, 4294901760
    %435 = vmatpush.msra.mxu0 %v434
    %v436 = vand.u32 %v110, 4294901760
    %437 = vmatpush.msra.mxu0 %v436
    %v438 = vand.u32 %v108, 4294901760
    %439 = vmatpush.msra.mxu0 %v438
    %v440 = vand.u32 %v106, 4294901760
    %441 = vmatpush.msra.mxu0 %v440
    %v442 = vand.u32 %v104, 4294901760
    %443 = vmatpush.msra.mxu0 %v442
    %v444 = vand.u32 %v102, 4294901760
    %445 = vmatpush.msra.mxu0 %v444
    %v446 = vand.u32 %v100, 4294901760
    %447 = vmatpush.msra.mxu0 %v446
    %v448 = vand.u32 %v98, 4294901760
    %449 = vmatpush.msra.mxu0 %v448
    %v450 = vand.u32 %v96, 4294901760
    %451 = vmatpush.msra.mxu0 %v450
    %v452 = vand.u32 %v94, 4294901760
    %453 = vmatpush.msra.mxu0 %v452
    %v454 = vand.u32 %v121, 4294901760
    %v455 = vsub.f32 %v121, %v454
    %v456 = vand.u32 %v455, 4294901760
    %v457 = vsub.f32 %v455, %v456
    %v458 = vand.u32 %v457, 4294901760
    %459 = vmatmul.f32.gmra.mxu0 %v458
    %v460 = vpop.f32.mrf.mxu0
    %v461 = vadd.f32 0.0, %v460
    %462 = vdwg.mxu0
    %463 = vmatpush.msra.mxu0 0.0
    %464 = vmatpush.msra.mxu0 0.0
    %465 = vmatpush.msra.mxu0 0.0
    %v466 = vand.u32 %v118, 4294901760
    %v467 = vsub.f32 %v118, %v466
    %v468 = vand.u32 %v467, 4294901760
    %v469 = vsub.f32 %v467, %v468
    %v470 = vand.u32 %v469, 4294901760
    %471 = vmatpush.msra.mxu0 %v470
    %v472 = vand.u32 %v116, 4294901760
    %v473 = vsub.f32 %v116, %v472
    %v474 = vand.u32 %v473, 4294901760
    %v475 = vsub.f32 %v473, %v474
    %v476 = vand.u32 %v475, 4294901760
    %477 = vmatpush.msra.mxu0 %v476
    %v478 = vand.u32 %v114, 4294901760
    %v479 = vsub.f32 %v114, %v478
    %v480 = vand.u32 %v479, 4294901760
    %v481 = vsub.f32 %v479, %v480
    %v482 = vand.u32 %v481, 4294901760
    %483 = vmatpush.msra.mxu0 %v482
    %v484 = vand.u32 %v112, 4294901760
    %v485 = vsub.f32 %v112, %v484
    %v486 = vand.u32 %v485, 4294901760
    %v487 = vsub.f32 %v485, %v486
    %v488 = vand.u32 %v487, 4294901760
    %489 = vmatpush.msra.mxu0 %v488
    %v490 = vand.u32 %v110, 4294901760
    %v491 = vsub.f32 %v110, %v490
    %v492 = vand.u32 %v491, 4294901760
    %v493 = vsub.f32 %v491, %v492
    %v494 = vand.u32 %v493, 4294901760
    %495 = vmatpush.msra.mxu0 %v494
    %v496 = vand.u32 %v108, 4294901760
    %v497 = vsub.f32 %v108, %v496
    %v498 = vand.u32 %v497, 4294901760
    %v499 = vsub.f32 %v497, %v498
    %v500 = vand.u32 %v499, 4294901760
    %501 = vmatpush.msra.mxu0 %v500
    %v502 = vand.u32 %v106, 4294901760
    %v503 = vsub.f32 %v106, %v502
    %v504 = vand.u32 %v503, 4294901760
    %v505 = vsub.f32 %v503, %v504
    %v506 = vand.u32 %v505, 4294901760
    %507 = vmatpush.msra.mxu0 %v506
    %v508 = vand.u32 %v104, 4294901760
    %v509 = vsub.f32 %v104, %v508
    %v510 = vand.u32 %v509, 4294901760
    %v511 = vsub.f32 %v509, %v510
    %v512 = vand.u32 %v511, 4294901760
    %513 = vmatpush.msra.mxu0 %v512
    %v514 = vand.u32 %v102, 4294901760
    %v515 = vsub.f32 %v102, %v514
    %v516 = vand.u32 %v515, 4294901760
    %v517 = vsub.f32 %v515, %v516
    %v518 = vand.u32 %v517, 4294901760
    %519 = vmatpush.msra.mxu0 %v518
    %v520 = vand.u32 %v100, 4294901760
    %v521 = vsub.f32 %v100, %v520
    %v522 = vand.u32 %v521, 4294901760
    %v523 = vsub.f32 %v521, %v522
    %v524 = vand.u32 %v523, 4294901760
    %525 = vmatpush.msra.mxu0 %v524
    %v526 = vand.u32 %v98, 4294901760
    %v527 = vsub.f32 %v98, %v526
    %v528 = vand.u32 %v527, 4294901760
    %v529 = vsub.f32 %v527, %v528
    %v530 = vand.u32 %v529, 4294901760
    %531 = vmatpush.msra.mxu0 %v530
    %v532 = vand.u32 %v96, 4294901760
    %v533 = vsub.f32 %v96, %v532
    %v534 = vand.u32 %v533, 4294901760
    %v535 = vsub.f32 %v533, %v534
    %v536 = vand.u32 %v535, 4294901760
    %537 = vmatpush.msra.mxu0 %v536
    %v538 = vand.u32 %v94, 4294901760
    %v539 = vsub.f32 %v94, %v538
    %v540 = vand.u32 %v539, 4294901760
    %v541 = vsub.f32 %v539, %v540
    %v542 = vand.u32 %v541, 4294901760
    %543 = vmatpush.msra.mxu0 %v542
    %v544 = vand.u32 %v121, 4294901760
    %545 = vmatmul.f32.gmra.mxu0 %v544
    %v546 = vpop.f32.mrf.mxu0
    %v547 = vadd.f32 %v461, %v546
    %548 = vdwg.mxu0
    %549 = vmatpush.msra.mxu0 0.0
    %550 = vmatpush.msra.mxu0 0.0
    %551 = vmatpush.msra.mxu0 0.0
    %v552 = vand.u32 %v118, 4294901760
    %v553 = vsub.f32 %v118, %v552
    %554 = vmatpush.msra.mxu0 %v553
    %v555 = vand.u32 %v116, 4294901760
    %v556 = vsub.f32 %v116, %v555
    %557 = vmatpush.msra.mxu0 %v556
    %v558 = vand.u32 %v114, 4294901760
    %v559 = vsub.f32 %v114, %v558
    %560 = vmatpush.msra.mxu0 %v559
    %v561 = vand.u32 %v112, 4294901760
    %v562 = vsub.f32 %v112, %v561
    %563 = vmatpush.msra.mxu0 %v562
    %v564 = vand.u32 %v110, 4294901760
    %v565 = vsub.f32 %v110, %v564
    %566 = vmatpush.msra.mxu0 %v565
    %v567 = vand.u32 %v108, 4294901760
    %v568 = vsub.f32 %v108, %v567
    %569 = vmatpush.msra.mxu0 %v568
    %v570 = vand.u32 %v106, 4294901760
    %v571 = vsub.f32 %v106, %v570
    %572 = vmatpush.msra.mxu0 %v571
    %v573 = vand.u32 %v104, 4294901760
    %v574 = vsub.f32 %v104, %v573
    %575 = vmatpush.msra.mxu0 %v574
    %v576 = vand.u32 %v102, 4294901760
    %v577 = vsub.f32 %v102, %v576
    %578 = vmatpush.msra.mxu0 %v577
    %v579 = vand.u32 %v100, 4294901760
    %v580 = vsub.f32 %v100, %v579
    %581 = vmatpush.msra.mxu0 %v580
    %v582 = vand.u32 %v98, 4294901760
    %v583 = vsub.f32 %v98, %v582
    %584 = vmatpush.msra.mxu0 %v583
    %v585 = vand.u32 %v96, 4294901760
    %v586 = vsub.f32 %v96, %v585
    %587 = vmatpush.msra.mxu0 %v586
    %v588 = vand.u32 %v94, 4294901760
    %v589 = vsub.f32 %v94, %v588
    %590 = vmatpush.msra.mxu0 %v589
    %v591 = vand.u32 %v121, 4294901760
    %v592 = vsub.f32 %v121, %v591
    %593 = vmatmul.f32.gmra.mxu0 %v592
    %v594 = vpop.f32.mrf.mxu0
    %v595 = vadd.f32 %v547, %v594
    %596 = vdwg.mxu0
    %597 = vmatpush.msra.mxu0 0.0
    %598 = vmatpush.msra.mxu0 0.0
    %599 = vmatpush.msra.mxu0 0.0
    %v600 = vand.u32 %v118, 4294901760
    %601 = vmatpush.msra.mxu0 %v600
    %v602 = vand.u32 %v116, 4294901760
    %603 = vmatpush.msra.mxu0 %v602
    %v604 = vand.u32 %v114, 4294901760
    %605 = vmatpush.msra.mxu0 %v604
    %v606 = vand.u32 %v112, 4294901760
    %607 = vmatpush.msra.mxu0 %v606
    %v608 = vand.u32 %v110, 4294901760
    %609 = vmatpush.msra.mxu0 %v608
    %v610 = vand.u32 %v108, 4294901760
    %611 = vmatpush.msra.mxu0 %v610
    %v612 = vand.u32 %v106, 4294901760
    %613 = vmatpush.msra.mxu0 %v612
    %v614 = vand.u32 %v104, 4294901760
    %615 = vmatpush.msra.mxu0 %v614
    %v616 = vand.u32 %v102, 4294901760
    %617 = vmatpush.msra.mxu0 %v616
    %v618 = vand.u32 %v100, 4294901760
    %619 = vmatpush.msra.mxu0 %v618
    %v620 = vand.u32 %v98, 4294901760
    %621 = vmatpush.msra.mxu0 %v620
    %v622 = vand.u32 %v96, 4294901760
    %623 = vmatpush.msra.mxu0 %v622
    %v624 = vand.u32 %v94, 4294901760
    %625 = vmatpush.msra.mxu0 %v624
    %v626 = vand.u32 %v121, 4294901760
    %v627 = vsub.f32 %v121, %v626
    %v628 = vand.u32 %v627, 4294901760
    %629 = vmatmul.f32.gmra.mxu0 %v628
    %v630 = vpop.f32.mrf.mxu0
    %v631 = vadd.f32 %v595, %v630
    %632 = vdwg.mxu0
    %633 = vmatpush.msra.mxu0 0.0
    %634 = vmatpush.msra.mxu0 0.0
    %635 = vmatpush.msra.mxu0 0.0
    %v636 = vand.u32 %v118, 4294901760
    %v637 = vsub.f32 %v118, %v636
    %v638 = vand.u32 %v637, 4294901760
    %639 = vmatpush.msra.mxu0 %v638
    %v640 = vand.u32 %v116, 4294901760
    %v641 = vsub.f32 %v116, %v640
    %v642 = vand.u32 %v641, 4294901760
    %643 = vmatpush.msra.mxu0 %v642
    %v644 = vand.u32 %v114, 4294901760
    %v645 = vsub.f32 %v114, %v644
    %v646 = vand.u32 %v645, 4294901760
    %647 = vmatpush.msra.mxu0 %v646
    %v648 = vand.u32 %v112, 4294901760
    %v649 = vsub.f32 %v112, %v648
    %v650 = vand.u32 %v649, 4294901760
    %651 = vmatpush.msra.mxu0 %v650
    %v652 = vand.u32 %v110, 4294901760
    %v653 = vsub.f32 %v110, %v652
    %v654 = vand.u32 %v653, 4294901760
    %655 = vmatpush.msra.mxu0 %v654
    %v656 = vand.u32 %v108, 4294901760
    %v657 = vsub.f32 %v108, %v656
    %v658 = vand.u32 %v657, 4294901760
    %659 = vmatpush.msra.mxu0 %v658
    %v660 = vand.u32 %v106, 4294901760
    %v661 = vsub.f32 %v106, %v660
    %v662 = vand.u32 %v661, 4294901760
    %663 = vmatpush.msra.mxu0 %v662
    %v664 = vand.u32 %v104, 4294901760
    %v665 = vsub.f32 %v104, %v664
    %v666 = vand.u32 %v665, 4294901760
    %667 = vmatpush.msra.mxu0 %v666
    %v668 = vand.u32 %v102, 4294901760
    %v669 = vsub.f32 %v102, %v668
    %v670 = vand.u32 %v669, 4294901760
    %671 = vmatpush.msra.mxu0 %v670
    %v672 = vand.u32 %v100, 4294901760
    %v673 = vsub.f32 %v100, %v672
    %v674 = vand.u32 %v673, 4294901760
    %675 = vmatpush.msra.mxu0 %v674
    %v676 = vand.u32 %v98, 4294901760
    %v677 = vsub.f32 %v98, %v676
    %v678 = vand.u32 %v677, 4294901760
    %679 = vmatpush.msra.mxu0 %v678
    %v680 = vand.u32 %v96, 4294901760
    %v681 = vsub.f32 %v96, %v680
    %v682 = vand.u32 %v681, 4294901760
    %683 = vmatpush.msra.mxu0 %v682
    %v684 = vand.u32 %v94, 4294901760
    %v685 = vsub.f32 %v94, %v684
    %v686 = vand.u32 %v685, 4294901760
    %687 = vmatpush.msra.mxu0 %v686
    %v688 = vand.u32 %v121, 4294901760
    %689 = vmatmul.f32.gmra.mxu0 %v688
    %v690 = vpop.f32.mrf.mxu0
    %v691 = vadd.f32 %v631, %v690
    %692 = vdwg.mxu0
    %693 = vmatpush.msra.mxu0 0.0
    %694 = vmatpush.msra.mxu0 0.0
    %695 = vmatpush.msra.mxu0 0.0
    %v696 = vand.u32 %v118, 4294901760
    %697 = vmatpush.msra.mxu0 %v696
    %v698 = vand.u32 %v116, 4294901760
    %699 = vmatpush.msra.mxu0 %v698
    %v700 = vand.u32 %v114, 4294901760
    %701 = vmatpush.msra.mxu0 %v700
    %v702 = vand.u32 %v112, 4294901760
    %703 = vmatpush.msra.mxu0 %v702
    %v704 = vand.u32 %v110, 4294901760
    %705 = vmatpush.msra.mxu0 %v704
    %v706 = vand.u32 %v108, 4294901760
    %707 = vmatpush.msra.mxu0 %v706
    %v708 = vand.u32 %v106, 4294901760
    %709 = vmatpush.msra.mxu0 %v708
    %v710 = vand.u32 %v104, 4294901760
    %711 = vmatpush.msra.mxu0 %v710
    %v712 = vand.u32 %v102, 4294901760
    %713 = vmatpush.msra.mxu0 %v712
    %v714 = vand.u32 %v100, 4294901760
    %715 = vmatpush.msra.mxu0 %v714
    %v716 = vand.u32 %v98, 4294901760
    %717 = vmatpush.msra.mxu0 %v716
    %v718 = vand.u32 %v96, 4294901760
    %719 = vmatpush.msra.mxu0 %v718
    %v720 = vand.u32 %v94, 4294901760
    %721 = vmatpush.msra.mxu0 %v720
    %v722 = vand.u32 %v121, 4294901760
    %723 = vmatmul.f32.gmra.mxu0 %v722
    %v724 = vpop.f32.mrf.mxu0
    %v725 = vadd.f32 %v691, %v724
    %726 = vdwg.mxu0
    %v729 = vrot.slane %v725, 6
    %vm730 = vcmask 1041408
    %v731 = vsel %vm730, %v423, %v729
    %733 = vst [vmem:[#allocation7] sm:$0xf] %v731
    // Predicated region
    $region18: #{tpu_custom_call.1} parent=1 // pred_check
      _
    $region19: #{tpu_custom_call.1} parent=1 // pred_check_branch
      %735 = sbr.rel (0) target = $region21
    $region20: #{tpu_custom_call.1} parent=1 // pred_region
      %737 = vsyncadd [#allocation4], 0
      %s739 = sshll.u32 [#allocation7], 4
      %s740 = int_to_ptr.vmem [resolvable:$true] %s739
      %s741 = sshll.u32 %s2, 4
      %s742 = int_to_ptr.hbm [resolvable:$true] %s741
      %744 = dma.vmem_to_hbm [thread:$0]  %s740, 64, %s742, [#allocation4]
    $region21: #{tpu_custom_call.1} parent=1 // pred_fallthru
      _
    // Predicated region
    $region22: #{tpu_custom_call.1} parent=1 // pred_check
      _
    $region23: #{tpu_custom_call.1} parent=1 // pred_check_branch
      %746 = sbr.rel (0) target = $region25
    $region24: #{tpu_custom_call.1} parent=1 // pred_region
      %748 = dma.done [#allocation4], 64
    $region25: #{tpu_custom_call.1} parent=1 // pred_fallthru
      _
    %749 = vsyncpa [#allocation3], 1
    %750 = vsyncpa [#allocation6], 1
    %751 = vsyncpa [#allocation4], 1

</llo_original>
